<compile_context>
chip_gen: v5e
topology: v5e:2x2
jax: 0.10.0
libtpu: 0.0.40
codegen_flags: <defaults>
</compile_context>

<pallas_src>
import functools

import jax
import jax.numpy as jnp
from jax.experimental import pallas as pl
from jax.experimental.pallas import tpu as pltpu

_TAPS = tuple((dh, dw) for dh in (-1, 0, 1) for dw in (-1, 0, 1))


def _fill_padded(x_ref, pad_ref, *, OFF, L):
    """Zero the halos only; copy the batch block into the (lane-aligned) centre."""
    bN, Cin, Lp = pad_ref.shape
    pad_ref[:, :, :OFF] = jnp.zeros((bN, Cin, OFF), pad_ref.dtype)
    pad_ref[:, :, OFF + L:] = jnp.zeros((bN, Cin, Lp - OFF - L), pad_ref.dtype)
    # Single cast (input dtype -> matmul dtype) happens here, once per step.
    pad_ref[:, :, OFF:OFF + L] = x_ref[...].astype(pad_ref.dtype)


def _conv3x3_im2col_kernel(x_ref, mask_ref, w_ref, b_ref, o_ref,
                           pad_ref, col_ref, *, H, W, OFF, negative_slope):
    """Fused 3x3 conv (stride 1, pad 1): materialised im2col, one MXU matmul.

    x_ref:    (bN, Cin, L)            channels on sublanes, pixels on lanes
    mask_ref: (2, L)                  resident {0,1} left/right edge validity
    w_ref:    (Cout, 9*Cin)           im2col-ordered weights, matmul dtype
    b_ref:    (Cout, 1)               f32 bias column
    o_ref:    (bN, Cout, L)           lane-dense output block
    pad_ref:  (bN, Cin, OFF+L+128)    VMEM scratch, zero-halo'd flattened images
    col_ref:  (9*Cin, bN*L)           VMEM scratch, im2col matrix (matmul dtype)
    """
    bN, Cin, L = x_ref.shape
    _fill_padded(x_ref, pad_ref, OFF=OFF, L=L)

    not_left = mask_ref[0:1, :]    # (1, L) — needed for dw = -1
    not_right = mask_ref[1:2, :]   # (1, L) — needed for dw = +1

    # Build (9*Cin, bN*L): each tap is a static lane-shifted view of the
    # zero-halo'd flattened image (row over/underflow lands in the zero halo;
    # only horizontal wrap between adjacent rows needs masking).
    for b in range(bN):
        for t, (dh, dw) in enumerate(_TAPS):
            start = OFF + dh * W + dw
            v = pad_ref[b, :, start:start + L]            # (Cin, L)
            if dw == -1:
                v = v * not_left
            elif dw == 1:
                v = v * not_right
            col_ref[t * Cin:(t + 1) * Cin, b * L:(b + 1) * L] = v

    # One MXU matmul for the whole batch block, f32 accumulation.
    acc = jnp.dot(w_ref[...], col_ref[...], preferred_element_type=jnp.float32)
    acc = acc + b_ref[...]                                # (Cout, 1) broadcast
    if negative_slope is not None:
        acc = jnp.where(acc > 0, acc, negative_slope * acc)
    for b in range(bN):
        o_ref[b] = acc[:, b * L:(b + 1) * L].astype(o_ref.dtype)


def _conv3x3_direct_kernel(x_ref, mask_ref, w_ref, b_ref, o_ref,
                           pad_ref, *, H, W, OFF, negative_slope):
    """Fused 3x3 conv, no im2col materialisation: accumulate 9 per-tap matmuls.

    Preferred for real ResUnet channel counts (Cin >= ~32): avoids the 9x col
    scratch (v7x 64 MiB VMEM) and the 9x VMEM store pass (v5e single vst slot).
    w_ref: (9, Cout, Cin) in matmul dtype.
    """
    bN, Cin, L = x_ref.shape
    Cout = w_ref.shape[1]
    _fill_padded(x_ref, pad_ref, OFF=OFF, L=L)

    not_left = mask_ref[0:1, :]
    not_right = mask_ref[1:2, :]

    for b in range(bN):
        acc = jnp.zeros((Cout, L), jnp.float32)
        for t, (dh, dw) in enumerate(_TAPS):
            start = OFF + dh * W + dw
            v = pad_ref[b, :, start:start + L]            # (Cin, L)
            if dw == -1:
                v = v * not_left
            elif dw == 1:
                v = v * not_right
            acc = acc + jnp.dot(w_ref[t], v, preferred_element_type=jnp.float32)
        acc = acc + b_ref[...]
        if negative_slope is not None:
            acc = jnp.where(acc > 0, acc, negative_slope * acc)
        o_ref[b] = acc.astype(o_ref.dtype)


def conv3x3(x_nchw, weight, bias, *, negative_slope=0.2,
            matmul_dtype=jnp.float32, batch_block=None, use_im2col=None):
    """Conv2d(k=3, stride=1, padding=1) + bias + optional LeakyReLU. NCHW in/out.

    x_nchw: (N, Cin, H, W); weight: (Cout, Cin, 3, 3); bias: (Cout,).
    negative_slope=None disables the activation (ResUnet `output` conv).
    matmul_dtype=jnp.bfloat16 feeds the MXU bf16 operands (v6e/v7x) while
    keeping f32 accumulation and f32 epilogue.
    """
    N, Cin, H, W = x_nchw.shape
    Cout = weight.shape[0]
    L = H * W                       # ideally a multiple of 128 for lane-dense blocks
    OFF = 128                       # lane-aligned left halo (>= W + 1)
    PADR = 128                      # right halo (>= W + 1)
    assert W + 1 <= OFF and W + 1 <= PADR, "spatial width too large for fixed halo"

    if use_im2col is None:
        use_im2col = Cin < 32       # tiny Cin -> one big-K matmul; else direct
    if batch_block is None:
        batch_block = min(N, 8)
    while N % batch_block:
        batch_block -= 1
    bN = batch_block

    # Free reshape only: NCHW is already channels-major / pixels-minor.
    x_flat = x_nchw.reshape(N, Cin, L)

    # Resident {0,1} edge-validity masks (row 0: not-left-edge, row 1: not-right).
    col_idx = jnp.arange(L, dtype=jnp.int32) % W
    mask = jnp.stack([col_idx >= 1, col_idx <= W - 2]).astype(matmul_dtype)

    b_col = bias.reshape(Cout, 1).astype(jnp.float32)

    if use_im2col:
        # (Cout, Cin, 3, 3) -> (Cout, 9*Cin), minor order (kh, kw, cin),
        # pre-cast to the MXU operand dtype.
        w_mat = jnp.transpose(weight, (0, 2, 3, 1)).reshape(Cout, 9 * Cin)
        w_mat = w_mat.astype(matmul_dtype)
        w_spec = pl.BlockSpec((Cout, 9 * Cin), lambda n: (0, 0))
        kernel = functools.partial(_conv3x3_im2col_kernel, H=H, W=W, OFF=OFF,
                                   negative_slope=negative_slope)
        scratch = [pltpu.VMEM((bN, Cin, OFF + L + PADR), matmul_dtype),
                   pltpu.VMEM((9 * Cin, bN * L), matmul_dtype)]
    else:
        # (Cout, Cin, 3, 3) -> (9, Cout, Cin): per-tap weight slabs.
        w_mat = jnp.transpose(weight, (2, 3, 0, 1)).reshape(9, Cout, Cin)
        w_mat = w_mat.astype(matmul_dtype)
        w_spec = pl.BlockSpec((9, Cout, Cin), lambda n: (0, 0, 0))
        kernel = functools.partial(_conv3x3_direct_kernel, H=H, W=W, OFF=OFF,
                                   negative_slope=negative_slope)
        scratch = [pltpu.VMEM((bN, Cin, OFF + L + PADR), matmul_dtype)]

    out_flat = pl.pallas_call(
        kernel,
        out_shape=jax.ShapeDtypeStruct((N, Cout, L), x_nchw.dtype),
        grid_spec=pltpu.PrefetchScalarGridSpec(
            num_scalar_prefetch=0,
            grid=(N // bN,),
            in_specs=[
                pl.BlockSpec((bN, Cin, L), lambda n: (n, 0, 0)),
                pl.BlockSpec((2, L), lambda n: (0, 0)),
                w_spec,
                pl.BlockSpec((Cout, 1), lambda n: (0, 0)),
            ],
            out_specs=pl.BlockSpec((bN, Cout, L), lambda n: (n, 0, 0)),
            scratch_shapes=scratch,
        ),
        compiler_params=pltpu.CompilerParams(
            dimension_semantics=("parallel",),     # batch blocks over both v7x TCs
            # Tiny for the demo; for real shapes raise toward ~100 MiB on
            # v5e/v6e and keep <= ~56 MiB on v7x (64 MiB physical per core).
            vmem_limit_bytes=64 * 1024 * 1024,
        ),
    )(x_flat, mask, w_mat, b_col)

    # Free reshape back to NCHW.
    return out_flat.reshape(N, Cout, H, W)


def _reference_conv3x3(x, weight, bias, negative_slope):
    out = jax.lax.conv_general_dilated(
        x, weight, window_strides=(1, 1), padding=((1, 1), (1, 1)),
        dimension_numbers=("NCHW", "OIHW", "NCHW"))
    out = out + bias[None, :, None, None]
    if negative_slope is not None:
        out = jnp.where(out > 0, out, negative_slope * out)
    return out


if __name__ == "__main__":
    key = jax.random.PRNGKey(0)
    ka, kb, kw1, kb1, kw2, kb2 = jax.random.split(key, 6)

    # Shapes consistent with the ResUnet building blocks:
    # batch=2, in_channels = nc_a + nc_b = 4, spatial 16x16, out_channels = 8.
    N, H, W = 2, 16, 16
    nc_a = nc_b = 2
    Cin = nc_a + nc_b
    Cout = 8

    img_a = jax.random.normal(ka, (N, nc_a, H, W), dtype=jnp.float32)
    img_b = jax.random.normal(kb, (N, nc_b, H, W), dtype=jnp.float32)
    # ResUnet.forward starts with torch.cat([img_a, img_b], 1).
    x = jnp.concatenate([img_a, img_b], axis=1)

    w1 = 0.1 * jax.random.normal(kw1, (Cout, Cin, 3, 3), dtype=jnp.float32)
    b1 = 0.1 * jax.random.normal(kb1, (Cout,), dtype=jnp.float32)
    y_ref = _reference_conv3x3(x, w1, b1, 0.2)

    # Down/up-path conv block: 3x3 + LeakyReLU(0.2), im2col path (tiny Cin).
    y = jax.block_until_ready(conv3x3(x, w1, b1, negative_slope=0.2))
    assert y.shape == (N, Cout, H, W)
    assert jnp.allclose(y, y_ref, atol=5e-3, rtol=5e-3), "conv+lrelu mismatch"

    # No-im2col accumulate-9-matmuls path (the one used at real channel counts).
    y_direct = jax.block_until_ready(
        conv3x3(x, w1, b1, negative_slope=0.2, use_im2col=False))
    assert jnp.allclose(y_direct, y_ref, atol=5e-3, rtol=5e-3), "direct-path mismatch"

    # ResUnet `output` conv: 3x3 -> 2 channels, no activation.
    w2 = 0.1 * jax.random.normal(kw2, (2, Cout, 3, 3), dtype=jnp.float32)
    b2 = 0.1 * jax.random.normal(kb2, (2,), dtype=jnp.float32)
    z = jax.block_until_ready(conv3x3(y, w2, b2, negative_slope=None))
    z_ref = _reference_conv3x3(y, w2, b2, None)
    assert z.shape == (N, 2, H, W)
    assert jnp.allclose(z, z_ref, atol=5e-3, rtol=5e-3), "output conv mismatch"

    # bf16 MXU-operand variant (v6e/v7x); accumulation / epilogue stay f32.
    y_bf16 = jax.block_until_ready(
        conv3x3(x, w1, b1, negative_slope=0.2, matmul_dtype=jnp.bfloat16))
    assert jnp.allclose(y_bf16, y_ref, atol=5e-2, rtol=5e-2), "bf16 mismatch"

    print("KERNEL_OK")
</pallas_src>

<mosaic_0001>
module attributes {stable_mosaic.version = 11 : i64} {
  func.func @_conv3x3_im2col_kernel(%arg0: i32, %arg1: memref<2x4x256xf32, #tpu.memory_space<vmem>>, %arg2: memref<2x256xf32, #tpu.memory_space<vmem>>, %arg3: memref<8x36xf32, #tpu.memory_space<vmem>>, %arg4: memref<8x1xf32, #tpu.memory_space<vmem>>, %arg5: memref<2x8x256xf32, #tpu.memory_space<vmem>>, %arg6: memref<2x4x512xf32, #tpu.memory_space<vmem>>, %arg7: memref<36x512xf32, #tpu.memory_space<vmem>>) attributes {dimension_semantics = [#tpu.dimension_semantics<parallel>], iteration_bounds = array<i64: 1>, scalar_prefetch = 0 : i64, scratch_operands = 2 : i64, tpu.core_type = #tpu.core_type<tc>, window_params = [{transform_indices = @transform_0, window_bounds = array<i64: 2, 4, 256>}, {pipeline_mode = #tpu.pipeline_mode<synchronous>, transform_indices = @transform_1, window_bounds = array<i64: 2, 256>}, {pipeline_mode = #tpu.pipeline_mode<synchronous>, transform_indices = @transform_2, window_bounds = array<i64: 8, 36>}, {pipeline_mode = #tpu.pipeline_mode<synchronous>, transform_indices = @transform_3, window_bounds = array<i64: 8, 1>}, {transform_indices = @transform_4, window_bounds = array<i64: 2, 8, 256>}]} {
    %cst = arith.constant 0.000000e+00 : f32
    %0 = vector.broadcast %cst : f32 to vector<2x4x128xf32>
    %c0 = arith.constant 0 : index
    %c0_0 = arith.constant 0 : index
    %c0_1 = arith.constant 0 : index
    %1 = vector.load %arg6[%c0, %c0_0, %c0_1] : memref<2x4x512xf32, #tpu.memory_space<vmem>>, vector<2x4x128xf32>
    tpu.vector_store %arg6[%c0, %c0_0, %c0_1], %0 {strides = array<i32>} : memref<2x4x512xf32, #tpu.memory_space<vmem>>, vector<2x4x128xf32>,
    %cst_2 = arith.constant 0.000000e+00 : f32
    %2 = vector.broadcast %cst_2 : f32 to vector<2x4x128xf32>
    %c0_3 = arith.constant 0 : index
    %c0_4 = arith.constant 0 : index
    %c384 = arith.constant 384 : index
    %3 = vector.load %arg6[%c0_3, %c0_4, %c384] : memref<2x4x512xf32, #tpu.memory_space<vmem>>, vector<2x4x128xf32>
    tpu.vector_store %arg6[%c0_3, %c0_4, %c384], %2 {strides = array<i32>} : memref<2x4x512xf32, #tpu.memory_space<vmem>>, vector<2x4x128xf32>,
    %c0_5 = arith.constant 0 : index
    %c0_6 = arith.constant 0 : index
    %c0_7 = arith.constant 0 : index
    %4 = vector.load %arg1[%c0_5, %c0_6, %c0_7] : memref<2x4x256xf32, #tpu.memory_space<vmem>>, vector<2x4x256xf32>
    %c0_8 = arith.constant 0 : index
    %c0_9 = arith.constant 0 : index
    %c128 = arith.constant 128 : index
    %5 = vector.load %arg6[%c0_8, %c0_9, %c128] : memref<2x4x512xf32, #tpu.memory_space<vmem>>, vector<2x4x256xf32>
    tpu.vector_store %arg6[%c0_8, %c0_9, %c128], %4 {strides = array<i32>} : memref<2x4x512xf32, #tpu.memory_space<vmem>>, vector<2x4x256xf32>,
    %c0_10 = arith.constant 0 : index
    %c0_11 = arith.constant 0 : index
    %6 = vector.load %arg2[%c0_10, %c0_11] : memref<2x256xf32, #tpu.memory_space<vmem>>, vector<1x256xf32>
    %c1 = arith.constant 1 : index
    %c0_12 = arith.constant 0 : index
    %7 = vector.load %arg2[%c1, %c0_12] : memref<2x256xf32, #tpu.memory_space<vmem>>, vector<1x256xf32>
    %c0_13 = arith.constant 0 : index
    %c0_14 = arith.constant 0 : index
    %c111 = arith.constant 111 : index
    %8 = vector.load %arg6[%c0_13, %c0_14, %c111] : memref<2x4x512xf32, #tpu.memory_space<vmem>>, vector<1x4x256xf32>
    %9 = vector.shape_cast %8 : vector<1x4x256xf32> to vector<4x256xf32>
    %10 = vector.broadcast %6 : vector<1x256xf32> to vector<4x256xf32>
    %11 = arith.mulf %9, %10 : vector<4x256xf32>
    %c0_15 = arith.constant 0 : index
    %c0_16 = arith.constant 0 : index
    %12 = vector.load %arg7[%c0_15, %c0_16] : memref<36x512xf32, #tpu.memory_space<vmem>>, vector<4x256xf32>
    tpu.vector_store %arg7[%c0_15, %c0_16], %11 {strides = array<i32>} : memref<36x512xf32, #tpu.memory_space<vmem>>, vector<4x256xf32>,
    %c0_17 = arith.constant 0 : index
    %c0_18 = arith.constant 0 : index
    %c112 = arith.constant 112 : index
    %13 = vector.load %arg6[%c0_17, %c0_18, %c112] : memref<2x4x512xf32, #tpu.memory_space<vmem>>, vector<1x4x256xf32>
    %14 = vector.shape_cast %13 : vector<1x4x256xf32> to vector<4x256xf32>
    %c4 = arith.constant 4 : index
    %c0_19 = arith.constant 0 : index
    %15 = vector.load %arg7[%c4, %c0_19] : memref<36x512xf32, #tpu.memory_space<vmem>>, vector<4x256xf32>
    tpu.vector_store %arg7[%c4, %c0_19], %14 {strides = array<i32>} : memref<36x512xf32, #tpu.memory_space<vmem>>, vector<4x256xf32>,
    %c0_20 = arith.constant 0 : index
    %c0_21 = arith.constant 0 : index
    %c113 = arith.constant 113 : index
    %16 = vector.load %arg6[%c0_20, %c0_21, %c113] : memref<2x4x512xf32, #tpu.memory_space<vmem>>, vector<1x4x256xf32>
    %17 = vector.shape_cast %16 : vector<1x4x256xf32> to vector<4x256xf32>
    %18 = vector.broadcast %7 : vector<1x256xf32> to vector<4x256xf32>
    %19 = arith.mulf %17, %18 : vector<4x256xf32>
    %c8 = arith.constant 8 : index
    %c0_22 = arith.constant 0 : index
    %20 = vector.load %arg7[%c8, %c0_22] : memref<36x512xf32, #tpu.memory_space<vmem>>, vector<4x256xf32>
    tpu.vector_store %arg7[%c8, %c0_22], %19 {strides = array<i32>} : memref<36x512xf32, #tpu.memory_space<vmem>>, vector<4x256xf32>,
    %c0_23 = arith.constant 0 : index
    %c0_24 = arith.constant 0 : index
    %c127 = arith.constant 127 : index
    %21 = vector.load %arg6[%c0_23, %c0_24, %c127] : memref<2x4x512xf32, #tpu.memory_space<vmem>>, vector<1x4x256xf32>
    %22 = vector.shape_cast %21 : vector<1x4x256xf32> to vector<4x256xf32>
    %23 = vector.broadcast %6 : vector<1x256xf32> to vector<4x256xf32>
    %24 = arith.mulf %22, %23 : vector<4x256xf32>
    %c12 = arith.constant 12 : index
    %c0_25 = arith.constant 0 : index
    %25 = vector.load %arg7[%c12, %c0_25] : memref<36x512xf32, #tpu.memory_space<vmem>>, vector<4x256xf32>
    tpu.vector_store %arg7[%c12, %c0_25], %24 {strides = array<i32>} : memref<36x512xf32, #tpu.memory_space<vmem>>, vector<4x256xf32>,
    %c0_26 = arith.constant 0 : index
    %c0_27 = arith.constant 0 : index
    %c128_28 = arith.constant 128 : index
    %26 = vector.load %arg6[%c0_26, %c0_27, %c128_28] : memref<2x4x512xf32, #tpu.memory_space<vmem>>, vector<1x4x256xf32>
    %27 = vector.shape_cast %26 : vector<1x4x256xf32> to vector<4x256xf32>
    %c16 = arith.constant 16 : index
    %c0_29 = arith.constant 0 : index
    %28 = vector.load %arg7[%c16, %c0_29] : memref<36x512xf32, #tpu.memory_space<vmem>>, vector<4x256xf32>
    tpu.vector_store %arg7[%c16, %c0_29], %27 {strides = array<i32>} : memref<36x512xf32, #tpu.memory_space<vmem>>, vector<4x256xf32>,
    %c0_30 = arith.constant 0 : index
    %c0_31 = arith.constant 0 : index
    %c129 = arith.constant 129 : index
    %29 = vector.load %arg6[%c0_30, %c0_31, %c129] : memref<2x4x512xf32, #tpu.memory_space<vmem>>, vector<1x4x256xf32>
    %30 = vector.shape_cast %29 : vector<1x4x256xf32> to vector<4x256xf32>
    %31 = vector.broadcast %7 : vector<1x256xf32> to vector<4x256xf32>
    %32 = arith.mulf %30, %31 : vector<4x256xf32>
    %c20 = arith.constant 20 : index
    %c0_32 = arith.constant 0 : index
    %33 = vector.load %arg7[%c20, %c0_32] : memref<36x512xf32, #tpu.memory_space<vmem>>, vector<4x256xf32>
    tpu.vector_store %arg7[%c20, %c0_32], %32 {strides = array<i32>} : memref<36x512xf32, #tpu.memory_space<vmem>>, vector<4x256xf32>,
    %c0_33 = arith.constant 0 : index
    %c0_34 = arith.constant 0 : index
    %c143 = arith.constant 143 : index
    %34 = vector.load %arg6[%c0_33, %c0_34, %c143] : memref<2x4x512xf32, #tpu.memory_space<vmem>>, vector<1x4x256xf32>
    %35 = vector.shape_cast %34 : vector<1x4x256xf32> to vector<4x256xf32>
    %36 = vector.broadcast %6 : vector<1x256xf32> to vector<4x256xf32>
    %37 = arith.mulf %35, %36 : vector<4x256xf32>
    %c24 = arith.constant 24 : index
    %c0_35 = arith.constant 0 : index
    %38 = vector.load %arg7[%c24, %c0_35] : memref<36x512xf32, #tpu.memory_space<vmem>>, vector<4x256xf32>
    tpu.vector_store %arg7[%c24, %c0_35], %37 {strides = array<i32>} : memref<36x512xf32, #tpu.memory_space<vmem>>, vector<4x256xf32>,
    %c0_36 = arith.constant 0 : index
    %c0_37 = arith.constant 0 : index
    %c144 = arith.constant 144 : index
    %39 = vector.load %arg6[%c0_36, %c0_37, %c144] : memref<2x4x512xf32, #tpu.memory_space<vmem>>, vector<1x4x256xf32>
    %40 = vector.shape_cast %39 : vector<1x4x256xf32> to vector<4x256xf32>
    %c28 = arith.constant 28 : index
    %c0_38 = arith.constant 0 : index
    %41 = vector.load %arg7[%c28, %c0_38] : memref<36x512xf32, #tpu.memory_space<vmem>>, vector<4x256xf32>
    tpu.vector_store %arg7[%c28, %c0_38], %40 {strides = array<i32>} : memref<36x512xf32, #tpu.memory_space<vmem>>, vector<4x256xf32>,
    %c0_39 = arith.constant 0 : index
    %c0_40 = arith.constant 0 : index
    %c145 = arith.constant 145 : index
    %42 = vector.load %arg6[%c0_39, %c0_40, %c145] : memref<2x4x512xf32, #tpu.memory_space<vmem>>, vector<1x4x256xf32>
    %43 = vector.shape_cast %42 : vector<1x4x256xf32> to vector<4x256xf32>
    %44 = vector.broadcast %7 : vector<1x256xf32> to vector<4x256xf32>
    %45 = arith.mulf %43, %44 : vector<4x256xf32>
    %c32 = arith.constant 32 : index
    %c0_41 = arith.constant 0 : index
    %46 = vector.load %arg7[%c32, %c0_41] : memref<36x512xf32, #tpu.memory_space<vmem>>, vector<4x256xf32>
    tpu.vector_store %arg7[%c32, %c0_41], %45 {strides = array<i32>} : memref<36x512xf32, #tpu.memory_space<vmem>>, vector<4x256xf32>,
    %c1_42 = arith.constant 1 : index
    %c0_43 = arith.constant 0 : index
    %c111_44 = arith.constant 111 : index
    %47 = vector.load %arg6[%c1_42, %c0_43, %c111_44] : memref<2x4x512xf32, #tpu.memory_space<vmem>>, vector<1x4x256xf32>
    %48 = vector.shape_cast %47 : vector<1x4x256xf32> to vector<4x256xf32>
    %49 = vector.broadcast %6 : vector<1x256xf32> to vector<4x256xf32>
    %50 = arith.mulf %48, %49 : vector<4x256xf32>
    %c0_45 = arith.constant 0 : index
    %c256 = arith.constant 256 : index
    %51 = vector.load %arg7[%c0_45, %c256] : memref<36x512xf32, #tpu.memory_space<vmem>>, vector<4x256xf32>
    tpu.vector_store %arg7[%c0_45, %c256], %50 {strides = array<i32>} : memref<36x512xf32, #tpu.memory_space<vmem>>, vector<4x256xf32>,
    %c1_46 = arith.constant 1 : index
    %c0_47 = arith.constant 0 : index
    %c112_48 = arith.constant 112 : index
    %52 = vector.load %arg6[%c1_46, %c0_47, %c112_48] : memref<2x4x512xf32, #tpu.memory_space<vmem>>, vector<1x4x256xf32>
    %53 = vector.shape_cast %52 : vector<1x4x256xf32> to vector<4x256xf32>
    %c4_49 = arith.constant 4 : index
    %c256_50 = arith.constant 256 : index
    %54 = vector.load %arg7[%c4_49, %c256_50] : memref<36x512xf32, #tpu.memory_space<vmem>>, vector<4x256xf32>
    tpu.vector_store %arg7[%c4_49, %c256_50], %53 {strides = array<i32>} : memref<36x512xf32, #tpu.memory_space<vmem>>, vector<4x256xf32>,
    %c1_51 = arith.constant 1 : index
    %c0_52 = arith.constant 0 : index
    %c113_53 = arith.constant 113 : index
    %55 = vector.load %arg6[%c1_51, %c0_52, %c113_53] : memref<2x4x512xf32, #tpu.memory_space<vmem>>, vector<1x4x256xf32>
    %56 = vector.shape_cast %55 : vector<1x4x256xf32> to vector<4x256xf32>
    %57 = vector.broadcast %7 : vector<1x256xf32> to vector<4x256xf32>
    %58 = arith.mulf %56, %57 : vector<4x256xf32>
    %c8_54 = arith.constant 8 : index
    %c256_55 = arith.constant 256 : index
    %59 = vector.load %arg7[%c8_54, %c256_55] : memref<36x512xf32, #tpu.memory_space<vmem>>, vector<4x256xf32>
    tpu.vector_store %arg7[%c8_54, %c256_55], %58 {strides = array<i32>} : memref<36x512xf32, #tpu.memory_space<vmem>>, vector<4x256xf32>,
    %c1_56 = arith.constant 1 : index
    %c0_57 = arith.constant 0 : index
    %c127_58 = arith.constant 127 : index
    %60 = vector.load %arg6[%c1_56, %c0_57, %c127_58] : memref<2x4x512xf32, #tpu.memory_space<vmem>>, vector<1x4x256xf32>
    %61 = vector.shape_cast %60 : vector<1x4x256xf32> to vector<4x256xf32>
    %62 = vector.broadcast %6 : vector<1x256xf32> to vector<4x256xf32>
    %63 = arith.mulf %61, %62 : vector<4x256xf32>
    %c12_59 = arith.constant 12 : index
    %c256_60 = arith.constant 256 : index
    %64 = vector.load %arg7[%c12_59, %c256_60] : memref<36x512xf32, #tpu.memory_space<vmem>>, vector<4x256xf32>
    tpu.vector_store %arg7[%c12_59, %c256_60], %63 {strides = array<i32>} : memref<36x512xf32, #tpu.memory_space<vmem>>, vector<4x256xf32>,
    %c1_61 = arith.constant 1 : index
    %c0_62 = arith.constant 0 : index
    %c128_63 = arith.constant 128 : index
    %65 = vector.load %arg6[%c1_61, %c0_62, %c128_63] : memref<2x4x512xf32, #tpu.memory_space<vmem>>, vector<1x4x256xf32>
    %66 = vector.shape_cast %65 : vector<1x4x256xf32> to vector<4x256xf32>
    %c16_64 = arith.constant 16 : index
    %c256_65 = arith.constant 256 : index
    %67 = vector.load %arg7[%c16_64, %c256_65] : memref<36x512xf32, #tpu.memory_space<vmem>>, vector<4x256xf32>
    tpu.vector_store %arg7[%c16_64, %c256_65], %66 {strides = array<i32>} : memref<36x512xf32, #tpu.memory_space<vmem>>, vector<4x256xf32>,
    %c1_66 = arith.constant 1 : index
    %c0_67 = arith.constant 0 : index
    %c129_68 = arith.constant 129 : index
    %68 = vector.load %arg6[%c1_66, %c0_67, %c129_68] : memref<2x4x512xf32, #tpu.memory_space<vmem>>, vector<1x4x256xf32>
    %69 = vector.shape_cast %68 : vector<1x4x256xf32> to vector<4x256xf32>
    %70 = vector.broadcast %7 : vector<1x256xf32> to vector<4x256xf32>
    %71 = arith.mulf %69, %70 : vector<4x256xf32>
    %c20_69 = arith.constant 20 : index
    %c256_70 = arith.constant 256 : index
    %72 = vector.load %arg7[%c20_69, %c256_70] : memref<36x512xf32, #tpu.memory_space<vmem>>, vector<4x256xf32>
    tpu.vector_store %arg7[%c20_69, %c256_70], %71 {strides = array<i32>} : memref<36x512xf32, #tpu.memory_space<vmem>>, vector<4x256xf32>,
    %c1_71 = arith.constant 1 : index
    %c0_72 = arith.constant 0 : index
    %c143_73 = arith.constant 143 : index
    %73 = vector.load %arg6[%c1_71, %c0_72, %c143_73] : memref<2x4x512xf32, #tpu.memory_space<vmem>>, vector<1x4x256xf32>
    %74 = vector.shape_cast %73 : vector<1x4x256xf32> to vector<4x256xf32>
    %75 = vector.broadcast %6 : vector<1x256xf32> to vector<4x256xf32>
    %76 = arith.mulf %74, %75 : vector<4x256xf32>
    %c24_74 = arith.constant 24 : index
    %c256_75 = arith.constant 256 : index
    %77 = vector.load %arg7[%c24_74, %c256_75] : memref<36x512xf32, #tpu.memory_space<vmem>>, vector<4x256xf32>
    tpu.vector_store %arg7[%c24_74, %c256_75], %76 {strides = array<i32>} : memref<36x512xf32, #tpu.memory_space<vmem>>, vector<4x256xf32>,
    %c1_76 = arith.constant 1 : index
    %c0_77 = arith.constant 0 : index
    %c144_78 = arith.constant 144 : index
    %78 = vector.load %arg6[%c1_76, %c0_77, %c144_78] : memref<2x4x512xf32, #tpu.memory_space<vmem>>, vector<1x4x256xf32>
    %79 = vector.shape_cast %78 : vector<1x4x256xf32> to vector<4x256xf32>
    %c28_79 = arith.constant 28 : index
    %c256_80 = arith.constant 256 : index
    %80 = vector.load %arg7[%c28_79, %c256_80] : memref<36x512xf32, #tpu.memory_space<vmem>>, vector<4x256xf32>
    tpu.vector_store %arg7[%c28_79, %c256_80], %79 {strides = array<i32>} : memref<36x512xf32, #tpu.memory_space<vmem>>, vector<4x256xf32>,
    %c1_81 = arith.constant 1 : index
    %c0_82 = arith.constant 0 : index
    %c145_83 = arith.constant 145 : index
    %81 = vector.load %arg6[%c1_81, %c0_82, %c145_83] : memref<2x4x512xf32, #tpu.memory_space<vmem>>, vector<1x4x256xf32>
    %82 = vector.shape_cast %81 : vector<1x4x256xf32> to vector<4x256xf32>
    %83 = vector.broadcast %7 : vector<1x256xf32> to vector<4x256xf32>
    %84 = arith.mulf %82, %83 : vector<4x256xf32>
    %c32_84 = arith.constant 32 : index
    %c256_85 = arith.constant 256 : index
    %85 = vector.load %arg7[%c32_84, %c256_85] : memref<36x512xf32, #tpu.memory_space<vmem>>, vector<4x256xf32>
    tpu.vector_store %arg7[%c32_84, %c256_85], %84 {strides = array<i32>} : memref<36x512xf32, #tpu.memory_space<vmem>>, vector<4x256xf32>,
    %c0_86 = arith.constant 0 : index
    %c0_87 = arith.constant 0 : index
    %86 = vector.load %arg3[%c0_86, %c0_87] : memref<8x36xf32, #tpu.memory_space<vmem>>, vector<8x36xf32>
    %c0_88 = arith.constant 0 : index
    %c0_89 = arith.constant 0 : index
    %87 = vector.load %arg7[%c0_88, %c0_89] : memref<36x512xf32, #tpu.memory_space<vmem>>, vector<36x512xf32>
    %cst_90 = arith.constant dense<0.000000e+00> : vector<8x512xf32>
    %88 = tpu.matmul %86, %87, %cst_90 {dimension_numbers = #tpu.dot_dimension_numbers<[1], [0], [0], [1], [0, 0, 1, 1], [], []>} : vector<8x36xf32>, vector<36x512xf32>, vector<8x512xf32> -> vector<8x512xf32>
    %c0_91 = arith.constant 0 : index
    %c0_92 = arith.constant 0 : index
    %89 = vector.load %arg4[%c0_91, %c0_92] : memref<8x1xf32, #tpu.memory_space<vmem>>, vector<8x1xf32>
    %90 = vector.broadcast %89 : vector<8x1xf32> to vector<8x512xf32>
    %91 = arith.addf %88, %90 : vector<8x512xf32>
    %cst_93 = arith.constant 0.000000e+00 : f32
    %92 = vector.broadcast %cst_93 : f32 to vector<8x512xf32>
    %93 = arith.cmpf ogt, %91, %92 : vector<8x512xf32>
    %cst_94 = arith.constant 2.000000e-01 : f32
    %94 = vector.broadcast %cst_94 : f32 to vector<8x512xf32>
    %95 = arith.mulf %94, %91 : vector<8x512xf32>
    %96 = arith.select %93, %91, %95 : vector<8x512xi1>, vector<8x512xf32>
    %97 = vector.extract_strided_slice %96 {offsets = [0, 0], sizes = [8, 256], strides = [1, 1]} : vector<8x512xf32> to vector<8x256xf32>
    %c0_95 = arith.constant 0 : index
    %c0_96 = arith.constant 0 : index
    %c0_97 = arith.constant 0 : index
    %98 = vector.load %arg5[%c0_95, %c0_96, %c0_97] : memref<2x8x256xf32, #tpu.memory_space<vmem>>, vector<1x8x256xf32>
    %99 = vector.shape_cast %98 : vector<1x8x256xf32> to vector<8x256xf32>
    %100 = vector.shape_cast %97 : vector<8x256xf32> to vector<1x8x256xf32>
    tpu.vector_store %arg5[%c0_95, %c0_96, %c0_97], %100 {strides = array<i32>} : memref<2x8x256xf32, #tpu.memory_space<vmem>>, vector<1x8x256xf32>,
    %101 = vector.extract_strided_slice %96 {offsets = [0, 256], sizes = [8, 256], strides = [1, 1]} : vector<8x512xf32> to vector<8x256xf32>
    %c1_98 = arith.constant 1 : index
    %c0_99 = arith.constant 0 : index
    %c0_100 = arith.constant 0 : index
    %102 = vector.load %arg5[%c1_98, %c0_99, %c0_100] : memref<2x8x256xf32, #tpu.memory_space<vmem>>, vector<1x8x256xf32>
    %103 = vector.shape_cast %102 : vector<1x8x256xf32> to vector<8x256xf32>
    %104 = vector.shape_cast %101 : vector<8x256xf32> to vector<1x8x256xf32>
    tpu.vector_store %arg5[%c1_98, %c0_99, %c0_100], %104 {strides = array<i32>} : memref<2x8x256xf32, #tpu.memory_space<vmem>>, vector<1x8x256xf32>,
    return
  }
  func.func @transform_0(%arg0: i32) -> (i32, i32, i32) {
    %c0_i32 = arith.constant 0 : i32
    %c0_i32_0 = arith.constant 0 : i32
    %c0_i32_1 = arith.constant 0 : i32
    return %arg0, %c0_i32, %c0_i32_0 : i32, i32, i32
  }
  func.func @transform_1(%arg0: i32) -> (i32, i32) {
    %c0_i32 = arith.constant 0 : i32
    %c0_i32_0 = arith.constant 0 : i32
    %c0_i32_1 = arith.constant 0 : i32
    return %c0_i32, %c0_i32_0 : i32, i32
  }
  func.func @transform_2(%arg0: i32) -> (i32, i32) {
    %c0_i32 = arith.constant 0 : i32
    %c0_i32_0 = arith.constant 0 : i32
    %c0_i32_1 = arith.constant 0 : i32
    return %c0_i32, %c0_i32_0 : i32, i32
  }
  func.func @transform_3(%arg0: i32) -> (i32, i32) {
    %c0_i32 = arith.constant 0 : i32
    %c0_i32_0 = arith.constant 0 : i32
    %c0_i32_1 = arith.constant 0 : i32
    return %c0_i32, %c0_i32_0 : i32, i32
  }
  func.func @transform_4(%arg0: i32) -> (i32, i32, i32) {
    %c0_i32 = arith.constant 0 : i32
    %c0_i32_0 = arith.constant 0 : i32
    %c0_i32_1 = arith.constant 0 : i32
    return %arg0, %c0_i32, %c0_i32_0 : i32, i32, i32
  }
}

</mosaic_0001>

<llo_original>
// kernel: tpu_custom_call.1
$region0: #{tpu_custom_call.1}
  #allocation0 [shape = 'u32[]', space=smem, size = 0x4, offset = 0x4, fixed_abs, tag = 'smem constant byte address 0x4 - core index']
  #allocation1 [shape = 'u32[72,128]{1,0:T(1,128)}', space=vmem, size = 0x9000, scoped, tag = 'internal scratch']
  #allocation2 [shape = 'f32[2,4,512]{2,1,0:T(4,128)}', space=vmem, size = 0x4000, scoped, tag = 'scratch operand']
  #allocation3 [shape = 'f32[36,512]{1,0:T(8,128)}', space=vmem, size = 0x14000, scoped, tag = 'scratch operand']
  %s0 = inlined_call_operand.hbm [shape: f32[2,4,256], index: 0, kind: input, shape index: {}]
  %s1 = inlined_call_operand.hbm [shape: f32[2,256], index: 1, kind: input, shape index: {}]
  %s2 = inlined_call_operand.vmem [shape: f32[8,36], index: 2, kind: input, shape index: {}]
  %s3 = inlined_call_operand.vmem [shape: f32[8,1], index: 3, kind: input, shape index: {}]
  %s4 = inlined_call_operand.hbm [shape: f32[2,8,256], index: 4, kind: output, shape index: {}]
  %s5 = sld [smem:[#allocation0]]
  $region34: #{tpu_custom_call.1} parent=0
    _
  %s7 = ssub.s32 1, %s5
  %s8 = scalar_select 0, %s7, %s5
  $region1: #{tpu_custom_call.1} parent=0
    #allocation4 [shape = 'u8[8192]{0}', space=vmem, size = 0x2000, scoped, tag = 'input window, operand 0, single buffered']
    #allocation5 [shape = 's32[1]{0}', space=sflag, size = 0x4, scoped, tag = 'scoped memory for tpu_custom_call.1']
    #allocation6 [shape = 's32[1]{0}', space=sflag, size = 0x4, scoped, tag = 'scoped memory for tpu_custom_call.1']
    #allocation7 [shape = 'u8[2048]{0}', space=vmem, size = 0x800, scoped, tag = 'input window, operand 1, single buffered']
    #allocation8 [shape = 's32[1]{0}', space=sflag, size = 0x4, scoped, tag = 'scoped memory for tpu_custom_call.1']
    #allocation9 [shape = 'u8[16384]{0}', space=vmem, size = 0x4000, scoped, tag = 'output window, operand 0, single buffered']
    %9 = vsyncpa [#allocation5], 0
    %10 = vsyncpa [#allocation8], 0
    %11 = vsyncpa [#allocation6], 0
    // Predicated region
    $region2: #{tpu_custom_call.1} parent=1 // pred_check
      _
    $region3: #{tpu_custom_call.1} parent=1 // pred_check_branch
      %13 = sbr.rel (0) target = $region5
    $region4: #{tpu_custom_call.1} parent=1 // pred_region
      %15 = vsyncadd [#allocation5], 0
      %s16 = sshll.u32 %s0, 4
      %s17 = int_to_ptr.hbm [resolvable:$true] %s16
      %s18 = sshll.u32 [#allocation4], 4
      %s19 = int_to_ptr.vmem [resolvable:$true] %s18
      %24 = dma.hbm_to_vmem [thread:$0]  %s17, 256, %s19, [#allocation5], 128, 128, 8
    $region5: #{tpu_custom_call.1} parent=1 // pred_fallthru
      _
    // Predicated region
    $region6: #{tpu_custom_call.1} parent=1 // pred_check
      _
    $region7: #{tpu_custom_call.1} parent=1 // pred_check_branch
      %26 = sbr.rel (0) target = $region9
    $region8: #{tpu_custom_call.1} parent=1 // pred_region
      %28 = vsyncadd [#allocation8], 0
      %s30 = sshll.u32 %s1, 4
      %s31 = int_to_ptr.hbm [resolvable:$true] %s30
      %s32 = sshll.u32 [#allocation7], 4
      %s33 = int_to_ptr.vmem [resolvable:$true] %s32
      %35 = dma.hbm_to_vmem [thread:$0]  %s31, 64, %s33, [#allocation8]
    $region9: #{tpu_custom_call.1} parent=1 // pred_fallthru
      _
    // Predicated region
    $region10: #{tpu_custom_call.1} parent=1 // pred_check
      _
    $region11: #{tpu_custom_call.1} parent=1 // pred_check_branch
      %37 = sbr.rel (0) target = $region13
    $region12: #{tpu_custom_call.1} parent=1 // pred_region
      _
    $region13: #{tpu_custom_call.1} parent=1 // pred_fallthru
      _
    // Predicated region
    $region14: #{tpu_custom_call.1} parent=1 // pred_check
      _
    $region15: #{tpu_custom_call.1} parent=1 // pred_check_branch
      %39 = sbr.rel (0) target = $region17
    $region16: #{tpu_custom_call.1} parent=1 // pred_region
      _
    $region17: #{tpu_custom_call.1} parent=1 // pred_fallthru
      _
    // Predicated region
    $region18: #{tpu_custom_call.1} parent=1 // pred_check
      _
    $region19: #{tpu_custom_call.1} parent=1 // pred_check_branch
      %41 = sbr.rel (0) target = $region21
    $region20: #{tpu_custom_call.1} parent=1 // pred_region
      %43 = dma.done [#allocation5], 256
    $region21: #{tpu_custom_call.1} parent=1 // pred_fallthru
      _
    // Predicated region
    $region22: #{tpu_custom_call.1} parent=1 // pred_check
      _
    $region23: #{tpu_custom_call.1} parent=1 // pred_check_branch
      %45 = sbr.rel (0) target = $region25
    $region24: #{tpu_custom_call.1} parent=1 // pred_region
      %47 = dma.done [#allocation8], 64
    $region25: #{tpu_custom_call.1} parent=1 // pred_fallthru
      _
    %48 = vst [vmem:[#allocation2] sm:$0xf] 0.0
    %49 = vst [vmem:[#allocation2 + $0x10] sm:$0xf] 0.0
    %50 = vst [vmem:[#allocation2 + $0xc] sm:$0xf] 0.0
    %51 = vst [vmem:[#allocation2 + $0x1c] sm:$0xf] 0.0
    %v52 = vld [vmem:[#allocation4] sm:$0xff]
    %v53 = vld [vmem:[#allocation4 + $0x8] sm:$0xff]
    %54 = vst [vmem:[#allocation2 + $0x4] sm:$0xff] %v52
    %55 = vst [vmem:[#allocation2 + $0x14] sm:$0xff] %v53
    %v56 = vld [vmem:[#allocation7] ss:$2 sm:$0x3]
    %s57 = scalar_lea.vmem [#allocation7], 1
    %v58 = vld [vmem:[%s57] ss:$2 sm:$0x3]
    %v59 = vld [vmem:[#allocation2] sm:$0xff]
    %v60 = vld [vmem:[#allocation2 + $0x8] sm:$0xf]
    %v62 = vperm.slane %v56, 0
    %v63 = vperm.slane %v56, 1
    %v64 = vrot.slane %v63, 4
    %vm65 = vcmask 1043456
    %v66 = vsel %vm65, %v62, %v64
    %67 = vrot.lane.b32.xlu0 %v66, 111
    %v68 = vpop.permute.xlu0 %67
    %v69 = vrot.slane %v68, 4
    %vm70 = vcmask 908288
    %v71 = vsel %vm70, %v69, %v68
    %v74 = vmul.f32 %v59, %v71
    %v75 = vmul.f32 %v60, %v69
    %78 = vst [vmem:[#allocation1] ss:$2 sm:$0xff] %v74
    %s79 = scalar_lea.vmem [#allocation1], 16
    %80 = vst [vmem:[%s79] ss:$2 sm:$0xff] %v75
    %v81 = vld.sshfl [vmem:[#allocation1] sm:$0xff pattern:$0x75316420]
    %v82 = vld.sshfl [vmem:[#allocation1 + $0x8] sm:$0xff pattern:$0x75316420]
    %v83 = vld.sshfl [vmem:[#allocation1 + $0x10] sm:$0xff pattern:$0x75316420]
    %84 = vrot.lane.b32.xlu0 %v81, 17
    %v85 = vpop.permute.xlu0 %84
    %86 = vrot.lane.b32.xlu0 %v82, 17
    %v87 = vpop.permute.xlu0 %86
    %88 = vrot.lane.b32.xlu0 %v83, 17
    %v89 = vpop.permute.xlu0 %88
    %vm90 = vcmask 138240
    %v91 = vsel %vm90, %v85, %v87
    %v92 = vsel %vm90, %v87, %v89
    %95 = vst [vmem:[#allocation3] sm:$0xf] %v91
    %96 = vst [vmem:[#allocation3 + $0x8] sm:$0xf] %v92
    %v97 = vld [vmem:[#allocation2] sm:$0xff]
    %v98 = vld [vmem:[#allocation2 + $0x8] sm:$0xf]
    %s101 = scalar_lea.vmem [#allocation1], 1
    %102 = vst [vmem:[%s101] ss:$2 sm:$0xff] %v97
    %s103 = scalar_lea.vmem [#allocation1], 17
    %104 = vst [vmem:[%s103] ss:$2 sm:$0xff] %v98
    %v105 = vld.sshfl [vmem:[#allocation1] sm:$0xff pattern:$0x75316420]
    %v106 = vld.sshfl [vmem:[#allocation1 + $0x8] sm:$0xff pattern:$0x75316420]
    %v107 = vld.sshfl [vmem:[#allocation1 + $0x10] sm:$0xff pattern:$0x75316420]
    %108 = vrot.lane.b32.xlu0 %v105, 16
    %v109 = vpop.permute.xlu0 %108
    %110 = vrot.lane.b32.xlu0 %v106, 16
    %v111 = vpop.permute.xlu0 %110
    %112 = vrot.lane.b32.xlu0 %v107, 16
    %v113 = vpop.permute.xlu0 %112
    %vm114 = vcmask 130048
    %v115 = vsel %vm114, %v109, %v111
    %v116 = vsel %vm114, %v111, %v113
    %119 = vst [vmem:[#allocation3] sm:$0xf0] %v115
    %120 = vst [vmem:[#allocation3 + $0x8] sm:$0xf0] %v116
    %v121 = vld [vmem:[#allocation2] sm:$0xff]
    %v122 = vld [vmem:[#allocation2 + $0x8] sm:$0xf]
    %v124 = vperm.slane %v58, 0
    %v125 = vperm.slane %v58, 1
    %v126 = vrot.slane %v125, 4
    %v127 = vsel %vm65, %v124, %v126
    %128 = vrot.lane.b32.xlu0 %v127, 113
    %v129 = vpop.permute.xlu0 %128
    %v130 = vrot.slane %v129, 4
    %vm131 = vcmask 924672
    %v132 = vsel %vm131, %v130, %v129
    %v135 = vmul.f32 %v121, %v132
    %v136 = vmul.f32 %v122, %v130
    %139 = vst [vmem:[#allocation1] ss:$2 sm:$0xff] %v135
    %s140 = scalar_lea.vmem [#allocation1], 16
    %141 = vst [vmem:[%s140] ss:$2 sm:$0xff] %v136
    %v142 = vld.sshfl [vmem:[#allocation1] sm:$0xff pattern:$0x75316420]
    %v143 = vld.sshfl [vmem:[#allocation1 + $0x8] sm:$0xff pattern:$0x75316420]
    %v144 = vld.sshfl [vmem:[#allocation1 + $0x10] sm:$0xff pattern:$0x75316420]
    %145 = vrot.lane.b32.xlu0 %v142, 15
    %v146 = vpop.permute.xlu0 %145
    %147 = vrot.lane.b32.xlu0 %v143, 15
    %v148 = vpop.permute.xlu0 %147
    %149 = vrot.lane.b32.xlu0 %v144, 15
    %v150 = vpop.permute.xlu0 %149
    %vm151 = vcmask 121856
    %v152 = vsel %vm151, %v146, %v148
    %v153 = vsel %vm151, %v148, %v150
    %156 = vst [vmem:[#allocation3 + $0x20] sm:$0xf] %v152
    %157 = vst [vmem:[#allocation3 + $0x28] sm:$0xf] %v153
    %v158 = vld [vmem:[#allocation2] sm:$0xff]
    %v159 = vld [vmem:[#allocation2 + $0x8] sm:$0xf]
    %160 = vrot.lane.b32.xlu0 %v66, 127
    %v161 = vpop.permute.xlu0 %160
    %v162 = vrot.slane %v161, 4
    %vm163 = vcmask 1039360
    %v164 = vsel %vm163, %v162, %v161
    %v167 = vmul.f32 %v158, %v164
    %v168 = vmul.f32 %v159, %v162
    %s171 = scalar_lea.vmem [#allocation1], 1
    %172 = vst [vmem:[%s171] ss:$2 sm:$0xff] %v167
    %s173 = scalar_lea.vmem [#allocation1], 17
    %174 = vst [vmem:[%s173] ss:$2 sm:$0xff] %v168
    %v175 = vld.sshfl [vmem:[#allocation1] sm:$0xff pattern:$0x75316420]
    %v176 = vld.sshfl [vmem:[#allocation1 + $0x8] sm:$0xff pattern:$0x75316420]
    %v177 = vld.sshfl [vmem:[#allocation1 + $0x10] sm:$0xff pattern:$0x75316420]
    %178 = vrot.lane.b32.xlu0 %v175, 1
    %v179 = vpop.permute.xlu0 %178
    %180 = vrot.lane.b32.xlu0 %v176, 1
    %v181 = vpop.permute.xlu0 %180
    %182 = vrot.lane.b32.xlu0 %v177, 1
    %v183 = vpop.permute.xlu0 %182
    %vm184 = vcmask 7168
    %v185 = vsel %vm184, %v179, %v181
    %v186 = vsel %vm184, %v181, %v183
    %189 = vst [vmem:[#allocation3 + $0x20] sm:$0xf0] %v185
    %190 = vst [vmem:[#allocation3 + $0x28] sm:$0xf0] %v186
    %v191 = vld [vmem:[#allocation2 + $0x4] sm:$0xff]
    %193 = vst [vmem:[#allocation1] ss:$2 sm:$0xff] %v191
    %v194 = vld.sshfl [vmem:[#allocation1] sm:$0xff pattern:$0x75316420]
    %v195 = vld.sshfl [vmem:[#allocation1 + $0x8] sm:$0xff pattern:$0x75316420]
    %198 = vst [vmem:[#allocation3 + $0x40] sm:$0xf] %v194
    %199 = vst [vmem:[#allocation3 + $0x48] sm:$0xf] %v195
    %v200 = vld [vmem:[#allocation2 + $0x4] sm:$0xff]
    %v201 = vld [vmem:[#allocation2 + $0xc] sm:$0xf]
    %202 = vrot.lane.b32.xlu0 %v127, 1
    %v203 = vpop.permute.xlu0 %202
    %v204 = vrot.slane %v203, 4
    %v205 = vsel %vm184, %v204, %v203
    %v208 = vmul.f32 %v200, %v205
    %v209 = vmul.f32 %v201, %v204
    %s212 = scalar_lea.vmem [#allocation1], 1
    %213 = vst [vmem:[%s212] ss:$2 sm:$0xff] %v208
    %s214 = scalar_lea.vmem [#allocation1], 17
    %215 = vst [vmem:[%s214] ss:$2 sm:$0xff] %v209
    %v216 = vld.sshfl [vmem:[#allocation1] sm:$0xff pattern:$0x75316420]
    %v217 = vld.sshfl [vmem:[#allocation1 + $0x8] sm:$0xff pattern:$0x75316420]
    %v218 = vld.sshfl [vmem:[#allocation1 + $0x10] sm:$0xff pattern:$0x75316420]
    %219 = vrot.lane.b32.xlu0 %v216, 127
    %v220 = vpop.permute.xlu0 %219
    %221 = vrot.lane.b32.xlu0 %v217, 127
    %v222 = vpop.permute.xlu0 %221
    %223 = vrot.lane.b32.xlu0 %v218, 127
    %v224 = vpop.permute.xlu0 %223
    %v225 = vsel %vm163, %v220, %v222
    %v226 = vsel %vm163, %v222, %v224
    %229 = vst [vmem:[#allocation3 + $0x40] sm:$0xf0] %v225
    %230 = vst [vmem:[#allocation3 + $0x48] sm:$0xf0] %v226
    %v231 = vld [vmem:[#allocation2 + $0x4] sm:$0xff]
    %v232 = vld [vmem:[#allocation2 + $0xc] sm:$0xf]
    %233 = vrot.lane.b32.xlu0 %v66, 15
    %v234 = vpop.permute.xlu0 %233
    %v235 = vrot.slane %v234, 4
    %v236 = vsel %vm151, %v235, %v234
    %v239 = vmul.f32 %v231, %v236
    %v240 = vmul.f32 %v232, %v235
    %243 = vst [vmem:[#allocation1] ss:$2 sm:$0xff] %v239
    %s244 = scalar_lea.vmem [#allocation1], 16
    %245 = vst [vmem:[%s244] ss:$2 sm:$0xff] %v240
    %v246 = vld.sshfl [vmem:[#allocation1] sm:$0xff pattern:$0x75316420]
    %v247 = vld.sshfl [vmem:[#allocation1 + $0x8] sm:$0xff pattern:$0x75316420]
    %v248 = vld.sshfl [vmem:[#allocation1 + $0x10] sm:$0xff pattern:$0x75316420]
    %249 = vrot.lane.b32.xlu0 %v246, 113
    %v250 = vpop.permute.xlu0 %249
    %251 = vrot.lane.b32.xlu0 %v247, 113
    %v252 = vpop.permute.xlu0 %251
    %253 = vrot.lane.b32.xlu0 %v248, 113
    %v254 = vpop.permute.xlu0 %253
    %v255 = vsel %vm131, %v250, %v252
    %v256 = vsel %vm131, %v252, %v254
    %259 = vst [vmem:[#allocation3 + $0x60] sm:$0xf] %v255
    %260 = vst [vmem:[#allocation3 + $0x68] sm:$0xf] %v256
    %v261 = vld [vmem:[#allocation2 + $0x4] sm:$0xff]
    %v262 = vld [vmem:[#allocation2 + $0xc] sm:$0xf]
    %s265 = scalar_lea.vmem [#allocation1], 1
    %266 = vst [vmem:[%s265] ss:$2 sm:$0xff] %v261
    %s267 = scalar_lea.vmem [#allocation1], 17
    %268 = vst [vmem:[%s267] ss:$2 sm:$0xff] %v262
    %v269 = vld.sshfl [vmem:[#allocation1] sm:$0xff pattern:$0x75316420]
    %v270 = vld.sshfl [vmem:[#allocation1 + $0x8] sm:$0xff pattern:$0x75316420]
    %v271 = vld.sshfl [vmem:[#allocation1 + $0x10] sm:$0xff pattern:$0x75316420]
    %272 = vrot.lane.b32.xlu0 %v269, 112
    %v273 = vpop.permute.xlu0 %272
    %274 = vrot.lane.b32.xlu0 %v270, 112
    %v275 = vpop.permute.xlu0 %274
    %276 = vrot.lane.b32.xlu0 %v271, 112
    %v277 = vpop.permute.xlu0 %276
    %vm278 = vcmask 916480
    %v279 = vsel %vm278, %v273, %v275
    %v280 = vsel %vm278, %v275, %v277
    %283 = vst [vmem:[#allocation3 + $0x60] sm:$0xf0] %v279
    %284 = vst [vmem:[#allocation3 + $0x68] sm:$0xf0] %v280
    %v285 = vld [vmem:[#allocation2 + $0x4] sm:$0xff]
    %v286 = vld [vmem:[#allocation2 + $0xc] sm:$0xf]
    %287 = vrot.lane.b32.xlu0 %v127, 17
    %v288 = vpop.permute.xlu0 %287
    %v289 = vrot.slane %v288, 4
    %v290 = vsel %vm90, %v289, %v288
    %v293 = vmul.f32 %v285, %v290
    %v294 = vmul.f32 %v286, %v289
    %297 = vst [vmem:[#allocation1] ss:$2 sm:$0xff] %v293
    %s298 = scalar_lea.vmem [#allocation1], 16
    %299 = vst [vmem:[%s298] ss:$2 sm:$0xff] %v294
    %v300 = vld.sshfl [vmem:[#allocation1] sm:$0xff pattern:$0x75316420]
    %v301 = vld.sshfl [vmem:[#allocation1 + $0x8] sm:$0xff pattern:$0x75316420]
    %v302 = vld.sshfl [vmem:[#allocation1 + $0x10] sm:$0xff pattern:$0x75316420]
    %303 = vrot.lane.b32.xlu0 %v300, 111
    %v304 = vpop.permute.xlu0 %303
    %305 = vrot.lane.b32.xlu0 %v301, 111
    %v306 = vpop.permute.xlu0 %305
    %307 = vrot.lane.b32.xlu0 %v302, 111
    %v308 = vpop.permute.xlu0 %307
    %v309 = vsel %vm70, %v304, %v306
    %v310 = vsel %vm70, %v306, %v308
    %313 = vst [vmem:[#allocation3 + $0x80] sm:$0xf] %v309
    %314 = vst [vmem:[#allocation3 + $0x88] sm:$0xf] %v310
    %s315 = scalar_lea.vmem [#allocation2], 16
    %v316 = vld [vmem:[%s315] sm:$0xff]
    %v317 = vld [vmem:[%s315 + $0x8] sm:$0xf]
    %v318 = vmul.f32 %v316, %v71
    %v319 = vmul.f32 %v317, %v69
    %322 = vst [vmem:[#allocation1] ss:$2 sm:$0xff] %v318
    %s323 = scalar_lea.vmem [#allocation1], 16
    %324 = vst [vmem:[%s323] ss:$2 sm:$0xff] %v319
    %v325 = vld.sshfl [vmem:[#allocation1] sm:$0xff pattern:$0x75316420]
    %v326 = vld.sshfl [vmem:[#allocation1 + $0x8] sm:$0xff pattern:$0x75316420]
    %v327 = vld.sshfl [vmem:[#allocation1 + $0x10] sm:$0xff pattern:$0x75316420]
    %328 = vrot.lane.b32.xlu0 %v325, 17
    %v329 = vpop.permute.xlu0 %328
    %330 = vrot.lane.b32.xlu0 %v326, 17
    %v331 = vpop.permute.xlu0 %330
    %332 = vrot.lane.b32.xlu0 %v327, 17
    %v333 = vpop.permute.xlu0 %332
    %v334 = vsel %vm90, %v329, %v331
    %v335 = vsel %vm90, %v331, %v333
    %338 = vst [vmem:[#allocation3 + $0x10] sm:$0xf] %v334
    %339 = vst [vmem:[#allocation3 + $0x18] sm:$0xf] %v335
    %v340 = vld [vmem:[%s315] sm:$0xff]
    %v341 = vld [vmem:[%s315 + $0x8] sm:$0xf]
    %s344 = scalar_lea.vmem [#allocation1], 1
    %345 = vst [vmem:[%s344] ss:$2 sm:$0xff] %v340
    %s346 = scalar_lea.vmem [#allocation1], 17
    %347 = vst [vmem:[%s346] ss:$2 sm:$0xff] %v341
    %v348 = vld.sshfl [vmem:[#allocation1] sm:$0xff pattern:$0x75316420]
    %v349 = vld.sshfl [vmem:[#allocation1 + $0x8] sm:$0xff pattern:$0x75316420]
    %v350 = vld.sshfl [vmem:[#allocation1 + $0x10] sm:$0xff pattern:$0x75316420]
    %351 = vrot.lane.b32.xlu0 %v348, 16
    %v352 = vpop.permute.xlu0 %351
    %353 = vrot.lane.b32.xlu0 %v349, 16
    %v354 = vpop.permute.xlu0 %353
    %355 = vrot.lane.b32.xlu0 %v350, 16
    %v356 = vpop.permute.xlu0 %355
    %v357 = vsel %vm114, %v352, %v354
    %v358 = vsel %vm114, %v354, %v356
    %361 = vst [vmem:[#allocation3 + $0x10] sm:$0xf0] %v357
    %362 = vst [vmem:[#allocation3 + $0x18] sm:$0xf0] %v358
    %v363 = vld [vmem:[%s315] sm:$0xff]
    %v364 = vld [vmem:[%s315 + $0x8] sm:$0xf]
    %v365 = vmul.f32 %v363, %v132
    %v366 = vmul.f32 %v364, %v130
    %369 = vst [vmem:[#allocation1] ss:$2 sm:$0xff] %v365
    %s370 = scalar_lea.vmem [#allocation1], 16
    %371 = vst [vmem:[%s370] ss:$2 sm:$0xff] %v366
    %v372 = vld.sshfl [vmem:[#allocation1] sm:$0xff pattern:$0x75316420]
    %v373 = vld.sshfl [vmem:[#allocation1 + $0x8] sm:$0xff pattern:$0x75316420]
    %v374 = vld.sshfl [vmem:[#allocation1 + $0x10] sm:$0xff pattern:$0x75316420]
    %375 = vrot.lane.b32.xlu0 %v372, 15
    %v376 = vpop.permute.xlu0 %375
    %377 = vrot.lane.b32.xlu0 %v373, 15
    %v378 = vpop.permute.xlu0 %377
    %379 = vrot.lane.b32.xlu0 %v374, 15
    %v380 = vpop.permute.xlu0 %379
    %v381 = vsel %vm151, %v376, %v378
    %v382 = vsel %vm151, %v378, %v380
    %385 = vst [vmem:[#allocation3 + $0x30] sm:$0xf] %v381
    %386 = vst [vmem:[#allocation3 + $0x38] sm:$0xf] %v382
    %v387 = vld [vmem:[%s315] sm:$0xff]
    %v388 = vld [vmem:[%s315 + $0x8] sm:$0xf]
    %v389 = vmul.f32 %v387, %v164
    %v390 = vmul.f32 %v388, %v162
    %s393 = scalar_lea.vmem [#allocation1], 1
    %394 = vst [vmem:[%s393] ss:$2 sm:$0xff] %v389
    %s395 = scalar_lea.vmem [#allocation1], 17
    %396 = vst [vmem:[%s395] ss:$2 sm:$0xff] %v390
    %v397 = vld.sshfl [vmem:[#allocation1] sm:$0xff pattern:$0x75316420]
    %v398 = vld.sshfl [vmem:[#allocation1 + $0x8] sm:$0xff pattern:$0x75316420]
    %v399 = vld.sshfl [vmem:[#allocation1 + $0x10] sm:$0xff pattern:$0x75316420]
    %400 = vrot.lane.b32.xlu0 %v397, 1
    %v401 = vpop.permute.xlu0 %400
    %402 = vrot.lane.b32.xlu0 %v398, 1
    %v403 = vpop.permute.xlu0 %402
    %404 = vrot.lane.b32.xlu0 %v399, 1
    %v405 = vpop.permute.xlu0 %404
    %v406 = vsel %vm184, %v401, %v403
    %v407 = vsel %vm184, %v403, %v405
    %410 = vst [vmem:[#allocation3 + $0x30] sm:$0xf0] %v406
    %411 = vst [vmem:[#allocation3 + $0x38] sm:$0xf0] %v407
    %v412 = vld [vmem:[%s315 + $0x4] sm:$0xff]
    %414 = vst [vmem:[#allocation1] ss:$2 sm:$0xff] %v412
    %v415 = vld.sshfl [vmem:[#allocation1] sm:$0xff pattern:$0x75316420]
    %v416 = vld.sshfl [vmem:[#allocation1 + $0x8] sm:$0xff pattern:$0x75316420]
    %419 = vst [vmem:[#allocation3 + $0x50] sm:$0xf] %v415
    %420 = vst [vmem:[#allocation3 + $0x58] sm:$0xf] %v416
    %v421 = vld [vmem:[%s315 + $0x4] sm:$0xff]
    %v422 = vld [vmem:[%s315 + $0xc] sm:$0xf]
    %v423 = vmul.f32 %v421, %v205
    %v424 = vmul.f32 %v422, %v204
    %s427 = scalar_lea.vmem [#allocation1], 1
    %428 = vst [vmem:[%s427] ss:$2 sm:$0xff] %v423
    %s429 = scalar_lea.vmem [#allocation1], 17
    %430 = vst [vmem:[%s429] ss:$2 sm:$0xff] %v424
    %v431 = vld.sshfl [vmem:[#allocation1] sm:$0xff pattern:$0x75316420]
    %v432 = vld.sshfl [vmem:[#allocation1 + $0x8] sm:$0xff pattern:$0x75316420]
    %v433 = vld.sshfl [vmem:[#allocation1 + $0x10] sm:$0xff pattern:$0x75316420]
    %434 = vrot.lane.b32.xlu0 %v431, 127
    %v435 = vpop.permute.xlu0 %434
    %436 = vrot.lane.b32.xlu0 %v432, 127
    %v437 = vpop.permute.xlu0 %436
    %438 = vrot.lane.b32.xlu0 %v433, 127
    %v439 = vpop.permute.xlu0 %438
    %v440 = vsel %vm163, %v435, %v437
    %v441 = vsel %vm163, %v437, %v439
    %444 = vst [vmem:[#allocation3 + $0x50] sm:$0xf0] %v440
    %445 = vst [vmem:[#allocation3 + $0x58] sm:$0xf0] %v441
    %v446 = vld [vmem:[%s315 + $0x4] sm:$0xff]
    %v447 = vld [vmem:[%s315 + $0xc] sm:$0xf]
    %v448 = vmul.f32 %v446, %v236
    %v449 = vmul.f32 %v447, %v235
    %452 = vst [vmem:[#allocation1] ss:$2 sm:$0xff] %v448
    %s453 = scalar_lea.vmem [#allocation1], 16
    %454 = vst [vmem:[%s453] ss:$2 sm:$0xff] %v449
    %v455 = vld.sshfl [vmem:[#allocation1] sm:$0xff pattern:$0x75316420]
    %v456 = vld.sshfl [vmem:[#allocation1 + $0x8] sm:$0xff pattern:$0x75316420]
    %v457 = vld.sshfl [vmem:[#allocation1 + $0x10] sm:$0xff pattern:$0x75316420]
    %458 = vrot.lane.b32.xlu0 %v455, 113
    %v459 = vpop.permute.xlu0 %458
    %460 = vrot.lane.b32.xlu0 %v456, 113
    %v461 = vpop.permute.xlu0 %460
    %462 = vrot.lane.b32.xlu0 %v457, 113
    %v463 = vpop.permute.xlu0 %462
    %v464 = vsel %vm131, %v459, %v461
    %v465 = vsel %vm131, %v461, %v463
    %468 = vst [vmem:[#allocation3 + $0x70] sm:$0xf] %v464
    %469 = vst [vmem:[#allocation3 + $0x78] sm:$0xf] %v465
    %v470 = vld [vmem:[%s315 + $0x4] sm:$0xff]
    %v471 = vld [vmem:[%s315 + $0xc] sm:$0xf]
    %s474 = scalar_lea.vmem [#allocation1], 1
    %475 = vst [vmem:[%s474] ss:$2 sm:$0xff] %v470
    %s476 = scalar_lea.vmem [#allocation1], 17
    %477 = vst [vmem:[%s476] ss:$2 sm:$0xff] %v471
    %v478 = vld.sshfl [vmem:[#allocation1] sm:$0xff pattern:$0x75316420]
    %v479 = vld.sshfl [vmem:[#allocation1 + $0x8] sm:$0xff pattern:$0x75316420]
    %v480 = vld.sshfl [vmem:[#allocation1 + $0x10] sm:$0xff pattern:$0x75316420]
    %481 = vrot.lane.b32.xlu0 %v478, 112
    %v482 = vpop.permute.xlu0 %481
    %483 = vrot.lane.b32.xlu0 %v479, 112
    %v484 = vpop.permute.xlu0 %483
    %485 = vrot.lane.b32.xlu0 %v480, 112
    %v486 = vpop.permute.xlu0 %485
    %v487 = vsel %vm278, %v482, %v484
    %v488 = vsel %vm278, %v484, %v486
    %491 = vst [vmem:[#allocation3 + $0x70] sm:$0xf0] %v487
    %492 = vst [vmem:[#allocation3 + $0x78] sm:$0xf0] %v488
    %v493 = vld [vmem:[%s315 + $0x4] sm:$0xff]
    %v494 = vld [vmem:[%s315 + $0xc] sm:$0xf]
    %v495 = vmul.f32 %v493, %v290
    %v496 = vmul.f32 %v494, %v289
    %499 = vst [vmem:[#allocation1] ss:$2 sm:$0xff] %v495
    %s500 = scalar_lea.vmem [#allocation1], 16
    %501 = vst [vmem:[%s500] ss:$2 sm:$0xff] %v496
    %v502 = vld.sshfl [vmem:[#allocation1] sm:$0xff pattern:$0x75316420]
    %v503 = vld.sshfl [vmem:[#allocation1 + $0x8] sm:$0xff pattern:$0x75316420]
    %v504 = vld.sshfl [vmem:[#allocation1 + $0x10] sm:$0xff pattern:$0x75316420]
    %505 = vrot.lane.b32.xlu0 %v502, 111
    %v506 = vpop.permute.xlu0 %505
    %507 = vrot.lane.b32.xlu0 %v503, 111
    %v508 = vpop.permute.xlu0 %507
    %509 = vrot.lane.b32.xlu0 %v504, 111
    %v510 = vpop.permute.xlu0 %509
    %v511 = vsel %vm70, %v506, %v508
    %v512 = vsel %vm70, %v508, %v510
    %515 = vst [vmem:[#allocation3 + $0x90] sm:$0xf] %v511
    %516 = vst [vmem:[#allocation3 + $0x98] sm:$0xf] %v512
    %v517 = vld [vmem:[%s2] sm:$0xff]
    %v518 = vld [vmem:[#allocation3] sm:$0xff]
    %v519 = vld [vmem:[#allocation3 + $0x8] sm:$0xff]
    %v520 = vld [vmem:[#allocation3 + $0x10] sm:$0xff]
    %v521 = vld [vmem:[#allocation3 + $0x18] sm:$0xff]
    %v522 = vld [vmem:[#allocation3 + $0x20] sm:$0xff]
    %v523 = vld [vmem:[#allocation3 + $0x28] sm:$0xff]
    %v524 = vld [vmem:[#allocation3 + $0x30] sm:$0xff]
    %v525 = vld [vmem:[#allocation3 + $0x38] sm:$0xff]
    %v526 = vld [vmem:[#allocation3 + $0x40] sm:$0xff]
    %v527 = vld [vmem:[#allocation3 + $0x48] sm:$0xff]
    %v528 = vld [vmem:[#allocation3 + $0x50] sm:$0xff]
    %v529 = vld [vmem:[#allocation3 + $0x58] sm:$0xff]
    %v530 = vld [vmem:[#allocation3 + $0x60] sm:$0xff]
    %v531 = vld [vmem:[#allocation3 + $0x68] sm:$0xff]
    %v532 = vld [vmem:[#allocation3 + $0x70] sm:$0xff]
    %v533 = vld [vmem:[#allocation3 + $0x78] sm:$0xff]
    %v534 = vld [vmem:[#allocation3 + $0x80] sm:$0xf]
    %v535 = vld [vmem:[#allocation3 + $0x88] sm:$0xf]
    %v536 = vld [vmem:[#allocation3 + $0x90] sm:$0xf]
    %v537 = vld [vmem:[#allocation3 + $0x98] sm:$0xf]
    %v538 = vld [vmem:[%s3] sm:$0xff]
    %540 = vset.pattern.permute.xlu0 0
    %541 = vperm.xlu0 %540, %v538
    %v542 = vpop.permute.xlu0 %541
    %vm544 = vcmask 293888
    %v546 = vsel %vm544, %v517, 0
    %v549 = vsel %vm65, %v534, 0
    %v552 = vsel %vm65, %v535, 0
    %v555 = vsel %vm65, %v536, 0
    %v558 = vsel %vm65, %v537, 0
    %560 = vmatpush.msra.mxu0 0.0
    %561 = vmatpush.msra.mxu0 0.0
    %562 = vmatpush.msra.mxu0 0.0
    %563 = vmatpush.msra.mxu0 0.0
    %564 = vmatpush.msra.mxu0 0.0
    %565 = vmatpush.msra.mxu0 0.0
    %566 = vmatpush.msra.mxu0 0.0
    %567 = vmatpush.msra.mxu0 0.0
    %568 = vmatpush.msra.mxu0 0.0
    %569 = vmatpush.msra.mxu0 0.0
    %570 = vmatpush.msra.mxu0 0.0
    %571 = vmatpush.msra.mxu0 %v549
    %572 = vmatpush.msra.mxu0 %v530
    %573 = vmatpush.msra.mxu0 %v526
    %574 = vmatpush.msra.mxu0 %v522
    %575 = vmatpush.msra.mxu0 %v518
    %576 = vmatmul.f32.gmra.mxu0 %v546
    %v577 = vpop.f32.mrf.mxu0
    %v578 = vadd.f32 %v542, %v577
    %579 = vdwg.mxu0
    %580 = vmatpush.msra.mxu0 0.0
    %581 = vmatpush.msra.mxu0 0.0
    %582 = vmatpush.msra.mxu0 0.0
    %583 = vmatpush.msra.mxu0 0.0
    %584 = vmatpush.msra.mxu0 0.0
    %585 = vmatpush.msra.mxu0 0.0
    %586 = vmatpush.msra.mxu0 0.0
    %587 = vmatpush.msra.mxu0 0.0
    %588 = vmatpush.msra.mxu0 0.0
    %589 = vmatpush.msra.mxu0 0.0
    %590 = vmatpush.msra.mxu0 0.0
    %591 = vmatpush.msra.mxu0 %v552
    %592 = vmatpush.msra.mxu0 %v531
    %593 = vmatpush.msra.mxu0 %v527
    %594 = vmatpush.msra.mxu0 %v523
    %595 = vmatpush.msra.mxu0 %v519
    %596 = vmatmul.f32.gmra.mxu0 %v546
    %v597 = vpop.f32.mrf.mxu0
    %v598 = vadd.f32 %v542, %v597
    %599 = vdwg.mxu0
    %600 = vmatpush.msra.mxu0 0.0
    %601 = vmatpush.msra.mxu0 0.0
    %602 = vmatpush.msra.mxu0 0.0
    %603 = vmatpush.msra.mxu0 0.0
    %604 = vmatpush.msra.mxu0 0.0
    %605 = vmatpush.msra.mxu0 0.0
    %606 = vmatpush.msra.mxu0 0.0
    %607 = vmatpush.msra.mxu0 0.0
    %608 = vmatpush.msra.mxu0 0.0
    %609 = vmatpush.msra.mxu0 0.0
    %610 = vmatpush.msra.mxu0 0.0
    %611 = vmatpush.msra.mxu0 %v555
    %612 = vmatpush.msra.mxu0 %v532
    %613 = vmatpush.msra.mxu0 %v528
    %614 = vmatpush.msra.mxu0 %v524
    %615 = vmatpush.msra.mxu0 %v520
    %616 = vmatmul.f32.gmra.mxu0 %v546
    %v617 = vpop.f32.mrf.mxu0
    %v618 = vadd.f32 %v542, %v617
    %619 = vdwg.mxu0
    %620 = vmatpush.msra.mxu0 0.0
    %621 = vmatpush.msra.mxu0 0.0
    %622 = vmatpush.msra.mxu0 0.0
    %623 = vmatpush.msra.mxu0 0.0
    %624 = vmatpush.msra.mxu0 0.0
    %625 = vmatpush.msra.mxu0 0.0
    %626 = vmatpush.msra.mxu0 0.0
    %627 = vmatpush.msra.mxu0 0.0
    %628 = vmatpush.msra.mxu0 0.0
    %629 = vmatpush.msra.mxu0 0.0
    %630 = vmatpush.msra.mxu0 0.0
    %631 = vmatpush.msra.mxu0 %v558
    %632 = vmatpush.msra.mxu0 %v533
    %633 = vmatpush.msra.mxu0 %v529
    %634 = vmatpush.msra.mxu0 %v525
    %635 = vmatpush.msra.mxu0 %v521
    %636 = vmatmul.f32.gmra.mxu0 %v546
    %v637 = vpop.f32.mrf.mxu0
    %v638 = vadd.f32 %v542, %v637
    %639 = vdwg.mxu0
    %vm640 = vcmp.gt.f32.partialorder %v578, 0.0
    %vm641 = vcmp.gt.f32.partialorder %v598, 0.0
    %vm642 = vcmp.gt.f32.partialorder %v618, 0.0
    %vm643 = vcmp.gt.f32.partialorder %v638, 0.0
    %v644 = vmul.f32 %v578, 0.2
    %v645 = vmul.f32 %v598, 0.2
    %v646 = vmul.f32 %v618, 0.2
    %v647 = vmul.f32 %v638, 0.2
    %v648 = vsel %vm640, %v578, %v644
    %v649 = vsel %vm641, %v598, %v645
    %v650 = vsel %vm642, %v618, %v646
    %v651 = vsel %vm643, %v638, %v647
    %652 = vst [vmem:[#allocation9] sm:$0xff] %v648
    %653 = vst [vmem:[#allocation9 + $0x8] sm:$0xff] %v649
    %s654 = scalar_lea.vmem [#allocation9], 16
    %655 = vst [vmem:[%s654] sm:$0xff] %v650
    %656 = vst [vmem:[%s654 + $0x8] sm:$0xff] %v651
    // Predicated region
    $region26: #{tpu_custom_call.1} parent=1 // pred_check
      _
    $region27: #{tpu_custom_call.1} parent=1 // pred_check_branch
      %658 = sbr.rel (0) target = $region29
    $region28: #{tpu_custom_call.1} parent=1 // pred_region
      %660 = vsyncadd [#allocation6], 0
      %s661 = sshll.u32 [#allocation9], 4
      %s662 = int_to_ptr.vmem [resolvable:$true] %s661
      %s663 = sshll.u32 %s4, 4
      %s664 = int_to_ptr.hbm [resolvable:$true] %s663
      %669 = dma.vmem_to_hbm [thread:$0]  %s662, 512, %s664, [#allocation6], 256, 256, 16
    $region29: #{tpu_custom_call.1} parent=1 // pred_fallthru
      _
    // Predicated region
    $region30: #{tpu_custom_call.1} parent=1 // pred_check
      _
    $region31: #{tpu_custom_call.1} parent=1 // pred_check_branch
      %671 = sbr.rel (0) target = $region33
    $region32: #{tpu_custom_call.1} parent=1 // pred_region
      %673 = dma.done [#allocation6], 512
    $region33: #{tpu_custom_call.1} parent=1 // pred_fallthru
      _
    %674 = vsyncpa [#allocation5], 1
    %675 = vsyncpa [#allocation8], 1
    %676 = vsyncpa [#allocation6], 1

</llo_original>
